<compile_context>
chip_gen: v6e
topology: v6e:2x2x1
jax: 0.10.0
libtpu: 0.0.40
codegen_flags: <defaults>
</compile_context>

<pallas_src>
import functools

import jax
import jax.numpy as jnp
from jax.experimental import pallas as pl
from jax.experimental.pallas import tpu as pltpu

_VMEM_LIMIT = 32 * 1024 * 1024   # leave headroom on v7x's 64 MiB / TC


# ----------------------------------------------------------------------------
# Pallas kernels
# ----------------------------------------------------------------------------
def _conv_fused_kernel(x_ref, w_ref, b_ref, o_ref, col_ref,
                       *, offs, m, cin, relu, sigmoid):
    """Fused im2col + single long-K matmul + bias + activation.

    x_ref:   (1, Lp, Cin)    f32  zero-padded, row-flattened activations
    w_ref:   (9*Cin, CT)     bf16 weight tile (CT = Cout tile)
    b_ref:   (1, CT)         f32  bias tile
    o_ref:   (1, M, CT)      f32  output tile (M = H*(W+2), junk cols cropped in glue)
    col_ref: (M, 9*Cin)      bf16 VMEM scratch (the im2col operand)
    """
    # Build the (M, 9*Cin) matmul operand from 9 static slices of the padded
    # block.  Slices are contiguous rows; stores land on 64/128-lane-aligned
    # column offsets.
    for t, off in enumerate(offs):
        col_ref[:, t * cin:(t + 1) * cin] = (
            x_ref[0, off:off + m, :].astype(jnp.bfloat16))

    # One MXU push with K = 9*Cin, accumulation stays in the MXU result path.
    acc = jnp.dot(col_ref[...], w_ref[...], preferred_element_type=jnp.float32)
    acc = acc + b_ref[...]
    if relu:
        acc = jnp.maximum(acc, 0.0)
    if sigmoid:
        acc = jax.nn.sigmoid(acc)
    o_ref[0] = acc


def _maxpool_kernel(x_ref, o_ref):
    """2x2 max pool: max over the 4 pre-strided views.

    x_ref: (4, 1, HoWo, C)   o_ref: (1, HoWo, C)
    """
    o_ref[0] = jnp.maximum(jnp.maximum(x_ref[0, 0], x_ref[1, 0]),
                           jnp.maximum(x_ref[2, 0], x_ref[3, 0]))


# ----------------------------------------------------------------------------
# Wrappers (glue: padding, flattening, reshapes)
# ----------------------------------------------------------------------------
def conv3x3_same(x, w_k, b, *, relu=True, sigmoid=False):
    """3x3, stride 1, padding 1 conv (also used for stride-1 ConvTranspose).

    x:   (N, H, W, Cin) f32
    w_k: (9*Cin, Cout)  bf16, K ordered as (kh, kw, cin)
    b:   (Cout,)        f32
    """
    n, h, w, cin = x.shape
    cout = w_k.shape[-1]
    wp = w + 2                       # padded width == output row width in-kernel
    m = h * wp                       # output rows per batch element (incl. junk cols)
    extra = 8                        # slack rows so every tap slice is in-bounds
    lp = (h + 2) * wp + extra

    # Single zero-padded copy of the activations (no 9x im2col in HBM).
    xp = jnp.pad(x, ((0, 0), (1, 1), (1, 1), (0, 0)))
    flat = xp.reshape(n, (h + 2) * wp, cin)
    flat = jnp.pad(flat, ((0, 0), (0, extra), (0, 0)))          # (N, Lp, Cin)

    # Tap t=(kh*3+kw) of output row q is padded row q + kh*wp + kw.
    offs = tuple(kh * wp + kw for kh in range(3) for kw in range(3))

    # Cout tiling (lane-dense 128 tiles when possible) -> more grid steps for
    # pipelining / megacore sharding independent of batch size.
    ct = 128 if cout % 128 == 0 else cout
    jt = cout // ct

    bf = b.reshape(1, cout).astype(jnp.float32)
    kern = functools.partial(_conv_fused_kernel, offs=offs, m=m, cin=cin,
                             relu=relu, sigmoid=sigmoid)

    out = pl.pallas_call(
        kern,
        grid=(jt, n),                # Cout tiles outer, batch inner (weight block
                                     # constant across consecutive batch steps)
        in_specs=[
            pl.BlockSpec((1, lp, cin), lambda j, i: (i, 0, 0)),
            pl.BlockSpec((9 * cin, ct), lambda j, i: (0, j)),
            pl.BlockSpec((1, ct), lambda j, i: (0, j)),
        ],
        out_specs=pl.BlockSpec((1, m, ct), lambda j, i: (i, 0, j)),
        out_shape=jax.ShapeDtypeStruct((n, m, cout), jnp.float32),
        scratch_shapes=[pltpu.VMEM((m, 9 * cin), jnp.bfloat16)],
        compiler_params=pltpu.CompilerParams(
            dimension_semantics=("parallel", "parallel"),
            vmem_limit_bytes=_VMEM_LIMIT),
    )(flat, w_k, bf)

    # (N, H*Wp, Cout) -> (N, H, Wp, Cout), crop the 2 junk columns.
    return out.reshape(n, h, wp, cout)[:, :, :w, :]


def conv1x1_pad1_xla(x, w_mat, b):
    """Conv2d(3, 64, 1, padding=1) + ReLU.

    Left to plain XLA per the perf review: K=3 leaves the MXU idle, so a
    standalone pallas_call is pure launch/DMA overhead.  Note ReLU acts on the
    zero-padded border too (relu(bias) rings) -- matches PyTorch semantics.
    """
    xp = jnp.pad(x, ((0, 0), (1, 1), (1, 1), (0, 0)))
    y = jnp.einsum("nhwc,cd->nhwd", xp, w_mat) + b
    return jnp.maximum(y, 0.0)


def maxpool2x2(x):
    """MaxPool2d(2, 2) with floor semantics (odd dims cropped like PyTorch)."""
    n, h, w, c = x.shape
    ho, wo = h // 2, w // 2
    views = jnp.stack([
        x[:, 0:2 * ho:2, 0:2 * wo:2, :].reshape(n, ho * wo, c),
        x[:, 0:2 * ho:2, 1:2 * wo:2, :].reshape(n, ho * wo, c),
        x[:, 1:2 * ho:2, 0:2 * wo:2, :].reshape(n, ho * wo, c),
        x[:, 1:2 * ho:2, 1:2 * wo:2, :].reshape(n, ho * wo, c),
    ], axis=0)                                                  # (4, N, HoWo, C)
    out = pl.pallas_call(
        _maxpool_kernel,
        grid=(n,),
        in_specs=[pl.BlockSpec((4, 1, ho * wo, c), lambda i: (0, i, 0, 0))],
        out_specs=pl.BlockSpec((1, ho * wo, c), lambda i: (i, 0, 0)),
        out_shape=jax.ShapeDtypeStruct((n, ho * wo, c), jnp.float32),
        compiler_params=pltpu.CompilerParams(
            dimension_semantics=("parallel",),
            vmem_limit_bytes=_VMEM_LIMIT),
    )(views)
    return out.reshape(n, ho, wo, c)


def upsample2x(x):
    """nn.Upsample(scale_factor=2), nearest neighbor (pure data movement)."""
    return jnp.repeat(jnp.repeat(x, 2, axis=1), 2, axis=2)


# ----------------------------------------------------------------------------
# Parameters (deterministic synthetic init, shapes from Generator.__init__)
# ----------------------------------------------------------------------------
def build_params(key):
    # (kind, cin, cout, k): 'c' = Conv2d, 't' = ConvTranspose2d
    layer_specs = [
        ("c", 3, 64, 1), ("c", 64, 64, 3),                              # conv1
        ("c", 64, 128, 3), ("c", 128, 128, 3),                          # conv2
        ("c", 128, 256, 3), ("c", 256, 256, 3), ("c", 256, 256, 3),     # conv3
        ("c", 256, 512, 3), ("c", 512, 512, 3), ("c", 512, 512, 3),     # conv4
        ("c", 512, 512, 3), ("c", 512, 512, 3), ("c", 512, 512, 3),     # conv5_6 convs
        ("t", 512, 512, 3), ("t", 512, 512, 3), ("t", 512, 512, 3),     # conv5_6 convTs
        ("t", 512, 512, 3), ("t", 512, 512, 3), ("t", 512, 512, 3),     # conv7
        ("t", 512, 256, 3), ("t", 256, 256, 3), ("t", 256, 256, 3),     # conv8
        ("t", 256, 128, 3), ("t", 128, 128, 3),                         # conv9
        ("t", 128, 64, 3), ("t", 64, 64, 3), ("t", 64, 1, 3),           # conv10
    ]
    params = []
    for kind, cin, cout, k in layer_specs:
        key, kw, kb = jax.random.split(key, 3)
        scale = jnp.sqrt(2.0 / (cin * k * k))
        if kind == "c":
            w = jax.random.normal(kw, (cout, cin, k, k), jnp.float32) * scale  # OIHW
            w_hwio = jnp.transpose(w, (2, 3, 1, 0))
        else:
            w = jax.random.normal(kw, (cin, cout, k, k), jnp.float32) * scale  # IOHW
            # stride-1/pad-1 ConvTranspose2d == 3x3 same conv with flipped kernel
            w_hwio = jnp.transpose(jnp.flip(w, axis=(2, 3)), (2, 3, 0, 1))
        b = jax.random.normal(kb, (cout,), jnp.float32) * 0.01
        if k == 1:
            params.append((w_hwio.reshape(cin, cout), b))                     # f32 (3,64)
        else:
            params.append((w_hwio.reshape(k * k * cin, cout)
                           .astype(jnp.bfloat16), b))                          # bf16 (9Cin,Cout)
    return params


# ----------------------------------------------------------------------------
# Forward pass (mirrors Generator.forward)
# ----------------------------------------------------------------------------
def generator_forward(params, x_nchw):
    x = jnp.transpose(x_nchw, (0, 2, 3, 1)).astype(jnp.float32)   # NCHW -> NHWC
    idx = 0

    def conv(x, relu=True, sigmoid=False):
        nonlocal idx
        w, b = params[idx]
        idx += 1
        return conv3x3_same(x, w, b, relu=relu, sigmoid=sigmoid)

    # conv1: Conv2d(3,64,1,padding=1)+ReLU (XLA), Conv2d(64,64,3,padding=1)+ReLU
    w, b = params[idx]; idx += 1
    x = conv1x1_pad1_xla(x, w, b)
    x = conv(x)
    x = maxpool2x2(x)
    x = conv(x); x = conv(x)                                      # conv2
    x = maxpool2x2(x)
    x = conv(x); x = conv(x); x = conv(x)                         # conv3
    x = maxpool2x2(x)
    x = conv(x); x = conv(x); x = conv(x)                         # conv4
    x = maxpool2x2(x)
    for _ in range(6):                                            # conv5_6
        x = conv(x)
    x = upsample2x(x)
    for _ in range(3):                                            # conv7
        x = conv(x)
    x = upsample2x(x)
    for _ in range(3):                                            # conv8
        x = conv(x)
    x = upsample2x(x)
    for _ in range(2):                                            # conv9
        x = conv(x)
    x = upsample2x(x)
    x = conv(x); x = conv(x)                                      # conv10 (ReLU)
    x = conv(x, relu=False, sigmoid=True)                         # last convT + Sigmoid
    return jnp.transpose(x, (0, 3, 1, 2))                         # NHWC -> NCHW


# ----------------------------------------------------------------------------
# Sanity check of the fused conv kernel against XLA's conv (bf16 weights)
# ----------------------------------------------------------------------------
def _check_conv_against_xla():
    k1, k2, k3 = jax.random.split(jax.random.PRNGKey(42), 3)
    cin, cout = 64, 128
    x = jax.random.normal(k1, (2, 6, 6, cin), jnp.float32)
    w_hwio = jax.random.normal(k2, (3, 3, cin, cout), jnp.float32) * 0.05
    b = jax.random.normal(k3, (cout,), jnp.float32) * 0.1
    w_bf = w_hwio.astype(jnp.bfloat16)
    got = conv3x3_same(x, w_bf.reshape(9 * cin, cout), b, relu=True)
    ref = jax.lax.conv_general_dilated(
        x, w_bf.astype(jnp.float32), window_strides=(1, 1), padding="SAME",
        dimension_numbers=("NHWC", "HWIO", "NHWC"))
    ref = jnp.maximum(ref + b, 0.0)
    err = float(jnp.max(jnp.abs(got - ref)))
    assert err < 5e-2, f"conv kernel mismatch, max abs err {err}"


if __name__ == "__main__":
    _check_conv_against_xla()

    key = jax.random.PRNGKey(0)
    pkey, xkey = jax.random.split(key)
    params = build_params(pkey)
    x = jax.random.normal(xkey, (2, 3, 16, 16), jnp.float32)      # NCHW like PyTorch

    fwd = jax.jit(generator_forward)
    y = jax.block_until_ready(fwd(params, x))

    assert y.shape == (2, 1, 16, 16), y.shape
    assert bool(jnp.all(jnp.isfinite(y)))
    assert bool(jnp.all((y >= 0.0) & (y <= 1.0)))
    print("KERNEL_OK")
</pallas_src>

<mosaic_0001>
module attributes {stable_mosaic.version = 11 : i64} {
  func.func @_conv_fused_kernel(%arg0: i32, %arg1: i32, %arg2: memref<1x72x64xf32, #tpu.memory_space<vmem>>, %arg3: memref<576x128xbf16, #tpu.memory_space<vmem>>, %arg4: memref<1x128xf32, #tpu.memory_space<vmem>>, %arg5: memref<1x48x128xf32, #tpu.memory_space<vmem>>, %arg6: memref<48x576xbf16, #tpu.memory_space<vmem>>) attributes {dimension_semantics = [#tpu.dimension_semantics<parallel>, #tpu.dimension_semantics<parallel>], iteration_bounds = array<i64: 1, 2>, scalar_prefetch = 0 : i64, scratch_operands = 1 : i64, tpu.core_type = #tpu.core_type<tc>, window_params = [{transform_indices = @transform_0, window_bounds = array<i64: 1, 72, 64>}, {transform_indices = @transform_1, window_bounds = array<i64: 576, 128>}, {transform_indices = @transform_2, window_bounds = array<i64: 1, 128>}, {transform_indices = @transform_3, window_bounds = array<i64: 1, 48, 128>}]} {
    %c0 = arith.constant 0 : index
    %c0_0 = arith.constant 0 : index
    %c0_1 = arith.constant 0 : index
    %0 = vector.load %arg2[%c0, %c0_0, %c0_1] : memref<1x72x64xf32, #tpu.memory_space<vmem>>, vector<1x48x64xf32>
    %1 = vector.shape_cast %0 : vector<1x48x64xf32> to vector<48x64xf32>
    %2 = arith.truncf %1 : vector<48x64xf32> to vector<48x64xbf16>
    %c0_2 = arith.constant 0 : index
    %c0_3 = arith.constant 0 : index
    %3 = vector.load %arg6[%c0_2, %c0_3] : memref<48x576xbf16, #tpu.memory_space<vmem>>, vector<48x64xbf16>
    tpu.vector_store %arg6[%c0_2, %c0_3], %2 {strides = array<i32>} : memref<48x576xbf16, #tpu.memory_space<vmem>>, vector<48x64xbf16>,
    %c0_4 = arith.constant 0 : index
    %c1 = arith.constant 1 : index
    %c0_5 = arith.constant 0 : index
    %4 = vector.load %arg2[%c0_4, %c1, %c0_5] : memref<1x72x64xf32, #tpu.memory_space<vmem>>, vector<1x48x64xf32>
    %5 = vector.shape_cast %4 : vector<1x48x64xf32> to vector<48x64xf32>
    %6 = arith.truncf %5 : vector<48x64xf32> to vector<48x64xbf16>
    %c0_6 = arith.constant 0 : index
    %c64 = arith.constant 64 : index
    %7 = vector.load %arg6[%c0_6, %c64] : memref<48x576xbf16, #tpu.memory_space<vmem>>, vector<48x64xbf16>
    tpu.vector_store %arg6[%c0_6, %c64], %6 {strides = array<i32>} : memref<48x576xbf16, #tpu.memory_space<vmem>>, vector<48x64xbf16>,
    %c0_7 = arith.constant 0 : index
    %c2 = arith.constant 2 : index
    %c0_8 = arith.constant 0 : index
    %8 = vector.load %arg2[%c0_7, %c2, %c0_8] : memref<1x72x64xf32, #tpu.memory_space<vmem>>, vector<1x48x64xf32>
    %9 = vector.shape_cast %8 : vector<1x48x64xf32> to vector<48x64xf32>
    %10 = arith.truncf %9 : vector<48x64xf32> to vector<48x64xbf16>
    %c0_9 = arith.constant 0 : index
    %c128 = arith.constant 128 : index
    %11 = vector.load %arg6[%c0_9, %c128] : memref<48x576xbf16, #tpu.memory_space<vmem>>, vector<48x64xbf16>
    tpu.vector_store %arg6[%c0_9, %c128], %10 {strides = array<i32>} : memref<48x576xbf16, #tpu.memory_space<vmem>>, vector<48x64xbf16>,
    %c0_10 = arith.constant 0 : index
    %c8 = arith.constant 8 : index
    %c0_11 = arith.constant 0 : index
    %12 = vector.load %arg2[%c0_10, %c8, %c0_11] : memref<1x72x64xf32, #tpu.memory_space<vmem>>, vector<1x48x64xf32>
    %13 = vector.shape_cast %12 : vector<1x48x64xf32> to vector<48x64xf32>
    %14 = arith.truncf %13 : vector<48x64xf32> to vector<48x64xbf16>
    %c0_12 = arith.constant 0 : index
    %c192 = arith.constant 192 : index
    %15 = vector.load %arg6[%c0_12, %c192] : memref<48x576xbf16, #tpu.memory_space<vmem>>, vector<48x64xbf16>
    tpu.vector_store %arg6[%c0_12, %c192], %14 {strides = array<i32>} : memref<48x576xbf16, #tpu.memory_space<vmem>>, vector<48x64xbf16>,
    %c0_13 = arith.constant 0 : index
    %c9 = arith.constant 9 : index
    %c0_14 = arith.constant 0 : index
    %16 = vector.load %arg2[%c0_13, %c9, %c0_14] : memref<1x72x64xf32, #tpu.memory_space<vmem>>, vector<1x48x64xf32>
    %17 = vector.shape_cast %16 : vector<1x48x64xf32> to vector<48x64xf32>
    %18 = arith.truncf %17 : vector<48x64xf32> to vector<48x64xbf16>
    %c0_15 = arith.constant 0 : index
    %c256 = arith.constant 256 : index
    %19 = vector.load %arg6[%c0_15, %c256] : memref<48x576xbf16, #tpu.memory_space<vmem>>, vector<48x64xbf16>
    tpu.vector_store %arg6[%c0_15, %c256], %18 {strides = array<i32>} : memref<48x576xbf16, #tpu.memory_space<vmem>>, vector<48x64xbf16>,
    %c0_16 = arith.constant 0 : index
    %c10 = arith.constant 10 : index
    %c0_17 = arith.constant 0 : index
    %20 = vector.load %arg2[%c0_16, %c10, %c0_17] : memref<1x72x64xf32, #tpu.memory_space<vmem>>, vector<1x48x64xf32>
    %21 = vector.shape_cast %20 : vector<1x48x64xf32> to vector<48x64xf32>
    %22 = arith.truncf %21 : vector<48x64xf32> to vector<48x64xbf16>
    %c0_18 = arith.constant 0 : index
    %c320 = arith.constant 320 : index
    %23 = vector.load %arg6[%c0_18, %c320] : memref<48x576xbf16, #tpu.memory_space<vmem>>, vector<48x64xbf16>
    tpu.vector_store %arg6[%c0_18, %c320], %22 {strides = array<i32>} : memref<48x576xbf16, #tpu.memory_space<vmem>>, vector<48x64xbf16>,
    %c0_19 = arith.constant 0 : index
    %c16 = arith.constant 16 : index
    %c0_20 = arith.constant 0 : index
    %24 = vector.load %arg2[%c0_19, %c16, %c0_20] : memref<1x72x64xf32, #tpu.memory_space<vmem>>, vector<1x48x64xf32>
    %25 = vector.shape_cast %24 : vector<1x48x64xf32> to vector<48x64xf32>
    %26 = arith.truncf %25 : vector<48x64xf32> to vector<48x64xbf16>
    %c0_21 = arith.constant 0 : index
    %c384 = arith.constant 384 : index
    %27 = vector.load %arg6[%c0_21, %c384] : memref<48x576xbf16, #tpu.memory_space<vmem>>, vector<48x64xbf16>
    tpu.vector_store %arg6[%c0_21, %c384], %26 {strides = array<i32>} : memref<48x576xbf16, #tpu.memory_space<vmem>>, vector<48x64xbf16>,
    %c0_22 = arith.constant 0 : index
    %c17 = arith.constant 17 : index
    %c0_23 = arith.constant 0 : index
    %28 = vector.load %arg2[%c0_22, %c17, %c0_23] : memref<1x72x64xf32, #tpu.memory_space<vmem>>, vector<1x48x64xf32>
    %29 = vector.shape_cast %28 : vector<1x48x64xf32> to vector<48x64xf32>
    %30 = arith.truncf %29 : vector<48x64xf32> to vector<48x64xbf16>
    %c0_24 = arith.constant 0 : index
    %c448 = arith.constant 448 : index
    %31 = vector.load %arg6[%c0_24, %c448] : memref<48x576xbf16, #tpu.memory_space<vmem>>, vector<48x64xbf16>
    tpu.vector_store %arg6[%c0_24, %c448], %30 {strides = array<i32>} : memref<48x576xbf16, #tpu.memory_space<vmem>>, vector<48x64xbf16>,
    %c0_25 = arith.constant 0 : index
    %c18 = arith.constant 18 : index
    %c0_26 = arith.constant 0 : index
    %32 = vector.load %arg2[%c0_25, %c18, %c0_26] : memref<1x72x64xf32, #tpu.memory_space<vmem>>, vector<1x48x64xf32>
    %33 = vector.shape_cast %32 : vector<1x48x64xf32> to vector<48x64xf32>
    %34 = arith.truncf %33 : vector<48x64xf32> to vector<48x64xbf16>
    %c0_27 = arith.constant 0 : index
    %c512 = arith.constant 512 : index
    %35 = vector.load %arg6[%c0_27, %c512] : memref<48x576xbf16, #tpu.memory_space<vmem>>, vector<48x64xbf16>
    tpu.vector_store %arg6[%c0_27, %c512], %34 {strides = array<i32>} : memref<48x576xbf16, #tpu.memory_space<vmem>>, vector<48x64xbf16>,
    %c0_28 = arith.constant 0 : index
    %c0_29 = arith.constant 0 : index
    %36 = vector.load %arg6[%c0_28, %c0_29] : memref<48x576xbf16, #tpu.memory_space<vmem>>, vector<48x576xbf16>
    %c0_30 = arith.constant 0 : index
    %c0_31 = arith.constant 0 : index
    %37 = vector.load %arg3[%c0_30, %c0_31] : memref<576x128xbf16, #tpu.memory_space<vmem>>, vector<576x128xbf16>
    %cst = arith.constant dense<0.000000e+00> : vector<48x128xf32>
    %38 = tpu.matmul %36, %37, %cst {dimension_numbers = #tpu.dot_dimension_numbers<[1], [0], [0], [1], [0, 0, 1, 1], [], []>} : vector<48x576xbf16>, vector<576x128xbf16>, vector<48x128xf32> -> vector<48x128xf32>
    %c0_32 = arith.constant 0 : index
    %c0_33 = arith.constant 0 : index
    %39 = vector.load %arg4[%c0_32, %c0_33] : memref<1x128xf32, #tpu.memory_space<vmem>>, vector<1x128xf32>
    %40 = vector.broadcast %39 : vector<1x128xf32> to vector<48x128xf32>
    %41 = arith.addf %38, %40 : vector<48x128xf32>
    %cst_34 = arith.constant 0.000000e+00 : f32
    %42 = vector.broadcast %cst_34 : f32 to vector<48x128xf32>
    %43 = arith.maximumf %41, %42 : vector<48x128xf32>
    %c0_35 = arith.constant 0 : index
    %c0_36 = arith.constant 0 : index
    %c0_37 = arith.constant 0 : index
    %44 = vector.load %arg5[%c0_35, %c0_36, %c0_37] : memref<1x48x128xf32, #tpu.memory_space<vmem>>, vector<1x48x128xf32>
    %45 = vector.shape_cast %44 : vector<1x48x128xf32> to vector<48x128xf32>
    %46 = vector.shape_cast %43 : vector<48x128xf32> to vector<1x48x128xf32>
    tpu.vector_store %arg5[%c0_35, %c0_36, %c0_37], %46 {strides = array<i32>} : memref<1x48x128xf32, #tpu.memory_space<vmem>>, vector<1x48x128xf32>,
    return
  }
  func.func @transform_0(%arg0: i32, %arg1: i32) -> (i32, i32, i32) {
    %c0_i32 = arith.constant 0 : i32
    %c0_i32_0 = arith.constant 0 : i32
    %c0_i32_1 = arith.constant 0 : i32
    return %arg1, %c0_i32, %c0_i32_0 : i32, i32, i32
  }
  func.func @transform_1(%arg0: i32, %arg1: i32) -> (i32, i32) {
    %c0_i32 = arith.constant 0 : i32
    %c0_i32_0 = arith.constant 0 : i32
    return %c0_i32, %arg0 : i32, i32
  }
  func.func @transform_2(%arg0: i32, %arg1: i32) -> (i32, i32) {
    %c0_i32 = arith.constant 0 : i32
    %c0_i32_0 = arith.constant 0 : i32
    return %c0_i32, %arg0 : i32, i32
  }
  func.func @transform_3(%arg0: i32, %arg1: i32) -> (i32, i32, i32) {
    %c0_i32 = arith.constant 0 : i32
    %c0_i32_0 = arith.constant 0 : i32
    return %arg1, %c0_i32, %arg0 : i32, i32, i32
  }
}

</mosaic_0001>

<llo_original>
// kernel: tpu_custom_call.1
$region0: #{tpu_custom_call.1}
  #allocation0 [shape = 'u32[]', space=smem, size = 0x4, offset = 0x4, fixed_abs, tag = 'smem constant byte address 0x4 - core index']
  #allocation1 [shape = 'u32[144,128]{1,0:T(1,128)}', space=vmem, size = 0x12000, scoped, tag = 'internal scratch']
  #allocation2 [shape = 'bf16[48,576]{1,0:T(8,128)(2,1)}', space=vmem, size = 0xf000, scoped, tag = 'scratch operand']
  %s0 = inlined_call_operand.vmem [shape: f32[2,72,64], index: 0, kind: input, shape index: {}]
  %s1 = inlined_call_operand.hbm [shape: bf16[576,128], index: 1, kind: input, shape index: {}]
  %s2 = inlined_call_operand.vmem [shape: f32[1,128], index: 2, kind: input, shape index: {}]
  %s3 = inlined_call_operand.hbm [shape: f32[2,48,128], index: 3, kind: output, shape index: {}]
  %s4 = sld [smem:[#allocation0]]
  $region49: #{tpu_custom_call.1} parent=0
    _
  %s6 = ssub.s32 1, %s4
  %s7 = scalar_select 0, %s6, %s4
  $region1: #{tpu_custom_call.1} parent=0
    #allocation3 [shape = 'u8[147456]{0}', space=vmem, size = 0x24000, scoped, tag = 'input window, operand 1, single buffered']
    #allocation4 [shape = 's32[2]{0}', space=sflag, size = 0x8, scoped, tag = 'scoped memory for tpu_custom_call.1']
    #allocation5 [shape = 's32[2]{0}', space=sflag, size = 0x8, scoped, tag = 'scoped memory for tpu_custom_call.1']
    #allocation6 [shape = 'u8[49152]{0}', space=vmem, size = 0xc000, scoped, tag = 'output window, operand 0']
    %8 = vsyncpa [#allocation4], 0
    %9 = vsyncpa [#allocation5], 0
    %s10 = scalar_lea.sflag [#allocation5], 1
    %11 = vsyncpa %s10, 0
    loop: start=0, step=1, limit=4
    $region2: #{tpu_custom_call.1} parent=1 // loop_pre_header
      _
    $region3: #{tpu_custom_call.1} parent=1 // loop_header
      %s13 = sphi 0, %s17
      %p14 = scmp.ge.s32.totalorder %s13, 4
      %s20 = sphi 0, %s32
      %s21 = sphi 0, %s28
      %s22 = sphi 0, %s20
      %s23 = sphi 0, %s21
      %s24 = sphi 0, %s22
      %s25 = sphi 0, %s23
      %s35 = sphi 0, %s37
      %s38 = sphi 0, %s35
      %s39 = sphi 0, %s38
      %s55 = sphi 0, %s39
      %s61 = sphi 0, %s63
      %s64 = sphi 0, %s61
      %s65 = sphi 0, %s64
      %s81 = sphi 0, %s65
      %s87 = sphi 0, %s89
      %s90 = sphi 0, %s87
      %s91 = sphi 0, %s90
      %s107 = sphi 0, %s91
      %s115 = sphi 0, %s117
      %s118 = sphi 0, %s115
      %s119 = sphi 0, %s118
      %s135 = sphi 0, %s119
    $region4: #{tpu_custom_call.1} parent=1 // loop_header_branch
      %16 = sbr.rel (%p14) target = $region8
    $region5: #{tpu_custom_call.1} parent=1 // loop_body
      %s18 = ssub.s32 %s13, 1
      %s19 = ssub.s32 %s13, 2
      %s26 = sadd.s32 1, %s21
      %p27 = scmp.ge.s32.totalorder %s26, 2
      %s28 = scalar_select %p27, 0, %s26
      %s29 = sadd.s32 1, %s20
      %s30 = scalar_select %p27, %s29, %s20
      %p31 = scmp.ge.s32.totalorder %s30, 1
      %s32 = scalar_select %p31, 0, %s30
      %s33 = ssub.s32 %s21, %s28
      %p34 = scmp.eq.s32.totalorder %s33, 0
      %s36 = sadd.s32 %s35, 1
      %s37 = scalar_select %p34, %s35, %s36
      %p40 = pneg %p34
      %p41 = scmp.eq.s32.totalorder %s13, 1
      %p42 = por %p40, %p41
      %p43 = scmp.ne.s32.totalorder %s35, %s38
      %p44 = scmp.eq.s32.totalorder %s13, 0
      %p45 = por %p43, %p44
      %p46 = scmp.ne.s32.totalorder %s35, %s38
      %p47 = scmp.eq.s32.totalorder %s18, 1
      %p48 = por %p46, %p47
      %p49 = scmp.ne.s32.totalorder %s38, %s39
      %p50 = scmp.eq.s32.totalorder %s18, 0
      %p51 = por %p49, %p50
      %p52 = scmp.ne.s32.totalorder %s38, %s39
      %p53 = scmp.eq.s32.totalorder %s19, 1
      %p54 = por %p52, %p53
      %p56 = scmp.ne.s32.totalorder %s39, %s55
      %p57 = scmp.eq.s32.totalorder %s19, 0
      %p58 = por %p56, %p57
      %s59 = ssub.s32 %s20, %s32
      %p60 = scmp.eq.s32.totalorder %s59, 0
      %s62 = sadd.s32 %s61, 1
      %s63 = scalar_select %p60, %s61, %s62
      %p66 = pneg %p60
      %p67 = scmp.eq.s32.totalorder %s13, 1
      %p68 = por %p66, %p67
      %p69 = scmp.ne.s32.totalorder %s61, %s64
      %p70 = scmp.eq.s32.totalorder %s13, 0
      %p71 = por %p69, %p70
      %p72 = scmp.ne.s32.totalorder %s61, %s64
      %p73 = scmp.eq.s32.totalorder %s18, 1
      %p74 = por %p72, %p73
      %p75 = scmp.ne.s32.totalorder %s64, %s65
      %p76 = scmp.eq.s32.totalorder %s18, 0
      %p77 = por %p75, %p76
      %p78 = scmp.ne.s32.totalorder %s64, %s65
      %p79 = scmp.eq.s32.totalorder %s19, 1
      %p80 = por %p78, %p79
      %p82 = scmp.ne.s32.totalorder %s65, %s81
      %p83 = scmp.eq.s32.totalorder %s19, 0
      %p84 = por %p82, %p83
      %s85 = ssub.s32 %s20, %s32
      %p86 = scmp.eq.s32.totalorder %s85, 0
      %s88 = sadd.s32 %s87, 1
      %s89 = scalar_select %p86, %s87, %s88
      %p92 = pneg %p86
      %p93 = scmp.eq.s32.totalorder %s13, 1
      %p94 = por %p92, %p93
      %p95 = scmp.ne.s32.totalorder %s87, %s90
      %p96 = scmp.eq.s32.totalorder %s13, 0
      %p97 = por %p95, %p96
      %p98 = scmp.ne.s32.totalorder %s87, %s90
      %p99 = scmp.eq.s32.totalorder %s18, 1
      %p100 = por %p98, %p99
      %p101 = scmp.ne.s32.totalorder %s90, %s91
      %p102 = scmp.eq.s32.totalorder %s18, 0
      %p103 = por %p101, %p102
      %p104 = scmp.ne.s32.totalorder %s90, %s91
      %p105 = scmp.eq.s32.totalorder %s19, 1
      %p106 = por %p104, %p105
      %p108 = scmp.ne.s32.totalorder %s91, %s107
      %p109 = scmp.eq.s32.totalorder %s19, 0
      %p110 = por %p108, %p109
      %s111 = ssub.s32 %s21, %s28
      %s112 = ssub.s32 %s20, %s32
      %s113 = sor.u32 %s111, %s112
      %p114 = scmp.eq.s32.totalorder %s113, 0
      %s116 = sadd.s32 %s115, 1
      %s117 = scalar_select %p114, %s115, %s116
      %p120 = pneg %p114
      %p121 = scmp.eq.s32.totalorder %s13, 1
      %p122 = por %p120, %p121
      %p123 = scmp.ne.s32.totalorder %s115, %s118
      %p124 = scmp.eq.s32.totalorder %s13, 0
      %p125 = por %p123, %p124
      %p126 = scmp.ne.s32.totalorder %s115, %s118
      %p127 = scmp.eq.s32.totalorder %s18, 1
      %p128 = por %p126, %p127
      %p129 = scmp.ne.s32.totalorder %s118, %s119
      %p130 = scmp.eq.s32.totalorder %s18, 0
      %p131 = por %p129, %p130
      %p132 = scmp.ne.s32.totalorder %s118, %s119
      %p133 = scmp.eq.s32.totalorder %s19, 1
      %p134 = por %p132, %p133
      %p136 = scmp.ne.s32.totalorder %s119, %s135
      %p137 = scmp.eq.s32.totalorder %s19, 0
      %p138 = por %p136, %p137
      %p139 = scmp.le.s32.totalorder 1, %s13
      %p140 = scmp.lt.s32.totalorder %s13, 3
      %p141 = pnand %p139, %p140
      %p142 = pneg %p141
      // Predicated region
      $region9: #{tpu_custom_call.1} parent=5 // pred_check
        _
      $region10: #{tpu_custom_call.1} parent=5 // pred_check_branch
        %144 = sbr.rel (%p141) target = $region12
      $region11: #{tpu_custom_call.1} parent=5 // pred_region
        %s145 = ssub.s32 %s13, 1
        // Predicated region
        $region13: #{tpu_custom_call.1} parent=11 // pred_check
          %p146 = pneg %p77
        $region14: #{tpu_custom_call.1} parent=11 // pred_check_branch
          %148 = sbr.rel (%p146) target = $region16
        $region15: #{tpu_custom_call.1} parent=11 // pred_region
          %s150 = ssub.s32 4608, 4608
          %151 = vsyncadd [#allocation4], %s150
          %s152 = smul.addr %s22, 64
          %s153 = scalar_lea.hbm %s1, %s152
          %s154 = sshll.u32 [#allocation3], 4
          %s155 = int_to_ptr.vmem [resolvable:$true] %s154
          %160 = dma.hbm_to_vmem [thread:$0]  %s153, 4608, %s155, [#allocation4], 64, 64, 4
        $region16: #{tpu_custom_call.1} parent=11 // pred_fallthru
          _
        // Predicated region
        $region17: #{tpu_custom_call.1} parent=11 // pred_check
          %p161 = pneg %p103
        $region18: #{tpu_custom_call.1} parent=11 // pred_check_branch
          %163 = sbr.rel (%p161) target = $region20
        $region19: #{tpu_custom_call.1} parent=11 // pred_region
          %p164 = scmp.lt.s32.totalorder %s22, 0
          %s165 = scalar_select %p164, %s22, 0
          %s166 = scalar_lea.vmem %s2, %s165
        $region20: #{tpu_custom_call.1} parent=11 // pred_fallthru
          _
      $region12: #{tpu_custom_call.1} parent=5 // pred_fallthru
        _
      %p167 = scmp.lt.s32.totalorder %s13, 2
      // Predicated region
      $region21: #{tpu_custom_call.1} parent=5 // pred_check
        %p168 = pneg %p167
      $region22: #{tpu_custom_call.1} parent=5 // pred_check_branch
        %170 = sbr.rel (%p168) target = $region24
      $region23: #{tpu_custom_call.1} parent=5 // pred_region
        // Predicated region
        $region25: #{tpu_custom_call.1} parent=23 // pred_check
          %p171 = pneg %p45
        $region26: #{tpu_custom_call.1} parent=23 // pred_check_branch
          %173 = sbr.rel (%p171) target = $region28
        $region27: #{tpu_custom_call.1} parent=23 // pred_region
          %p174 = scmp.lt.s32.totalorder %s21, 1
          %s175 = scalar_select %p174, %s21, 1
          %s176 = smul.addr %s175, 9
          %s177 = smul.addr %s176, 8
          %s178 = scalar_lea.vmem %s0, %s177
        $region28: #{tpu_custom_call.1} parent=23 // pred_fallthru
          _
      $region24: #{tpu_custom_call.1} parent=5 // pred_fallthru
        _
      %p179 = scmp.le.s32.totalorder 1, %s13
      %p180 = scmp.lt.s32.totalorder %s13, 3
      %p181 = pnand %p179, %p180
      %p182 = pneg %p181
      // Predicated region
      $region29: #{tpu_custom_call.1} parent=5 // pred_check
        _
      $region30: #{tpu_custom_call.1} parent=5 // pred_check_branch
        %184 = sbr.rel (%p181) target = $region32
      $region31: #{tpu_custom_call.1} parent=5 // pred_region
        %s185 = ssub.s32 %s13, 1
        // Predicated region
        $region33: #{tpu_custom_call.1} parent=31 // pred_check
          %p186 = pneg %p77
        $region34: #{tpu_custom_call.1} parent=31 // pred_check_branch
          %188 = sbr.rel (%p186) target = $region36
        $region35: #{tpu_custom_call.1} parent=31 // pred_region
          %189 = dma.done [#allocation4], 4608
        $region36: #{tpu_custom_call.1} parent=31 // pred_fallthru
          _
        %p190 = scmp.lt.s32.totalorder %s23, 1
        %s191 = scalar_select %p190, %s23, 1
        %s192 = smul.addr %s191, 9
        %s193 = smul.addr %s192, 8
        %s194 = scalar_lea.vmem %s0, %s193
        %p195 = pneg %p51
        %p196 = pneg %p48
        %p197 = pneg %p77
        %p198 = pneg %p74
        %p199 = scmp.lt.s32.totalorder %s22, 0
        %s200 = scalar_select %p199, %s22, 0
        %s201 = scalar_lea.vmem %s2, %s200
        %p202 = pneg %p103
        %p203 = pneg %p100
        %p204 = pneg %p131
        %p205 = pneg %p128
        %s206 = sand.u32 %s118, 1
        %s207 = scalar_lea.sflag [#allocation5], %s206
        %s208 = sand.u32 %s118, 1
        %s209 = smul.addr %s208, 48
        %s210 = scalar_lea.vmem [#allocation6], %s209
        %p211 = scmp.lt.s32.totalorder %s23, 1
        %s212 = scalar_select %p211, %s23, 1
        %s213 = smul.addr %s212, 9
        %s214 = smul.addr %s213, 8
        %s215 = scalar_lea.vmem %s0, %s214
        %p216 = scmp.lt.s32.totalorder %s22, 0
        %s217 = scalar_select %p216, %s22, 0
        %s218 = scalar_lea.vmem %s2, %s217
        %v220 = vld [vmem:[%s215] sm:$0xff]
        %v221 = vld [vmem:[%s215 + $0x8] sm:$0xff]
        %v222 = vld [vmem:[%s215 + $0x10] sm:$0xff]
        %v223 = vld [vmem:[%s215 + $0x18] sm:$0xff]
        %v224 = vld [vmem:[%s215 + $0x20] sm:$0xff]
        %v225 = vld [vmem:[%s215 + $0x28] sm:$0xff]
        %v226 = vpack.c.bf16 %v221, %v220
        %v227 = vpack.c.bf16 %v223, %v222
        %v228 = vpack.c.bf16 %v225, %v224
        %v232 = vunpack.c.l.b16 %v226
        %v233 = vunpack.c.h.b16 %v226
        %v234 = vunpack.c.l.b16 %v227
        %v235 = vunpack.c.h.b16 %v227
        %v236 = vunpack.c.l.b16 %v228
        %v237 = vunpack.c.h.b16 %v228
        %v238 = vpack.c.b16 %v232, %v232
        %v239 = vpack.c.b16 %v233, %v233
        %v240 = vpack.c.b16 %v234, %v234
        %v241 = vpack.c.b16 %v235, %v235
        %v242 = vpack.c.b16 %v236, %v236
        %v243 = vpack.c.b16 %v237, %v237
        %vm250 = vcmask 519168
        %251 = vst.msk [vmem:[#allocation2] sm:$0xf] %vm250, %v238
        %252 = vst.msk [vmem:[#allocation2 + $0x14] sm:$0xf] %vm250, %v239
        %253 = vst.msk [vmem:[#allocation2 + $0x28] sm:$0xf] %vm250, %v240
        %254 = vst.msk [vmem:[#allocation2 + $0x3c] sm:$0xf] %vm250, %v241
        %255 = vst.msk [vmem:[#allocation2 + $0x50] sm:$0xf] %vm250, %v242
        %256 = vst.msk [vmem:[#allocation2 + $0x64] sm:$0xf] %vm250, %v243
        %v257 = vld [vmem:[%s215 + $0x1] sm:$0xff]
        %v258 = vld [vmem:[%s215 + $0x9] sm:$0xff]
        %v259 = vld [vmem:[%s215 + $0x11] sm:$0xff]
        %v260 = vld [vmem:[%s215 + $0x19] sm:$0xff]
        %v261 = vld [vmem:[%s215 + $0x21] sm:$0xff]
        %v262 = vld [vmem:[%s215 + $0x29] sm:$0xff]
        %v263 = vpack.c.bf16 %v258, %v257
        %v264 = vpack.c.bf16 %v260, %v259
        %v265 = vpack.c.bf16 %v262, %v261
        %v269 = vunpack.c.l.b16 %v263
        %v270 = vunpack.c.h.b16 %v263
        %v271 = vunpack.c.l.b16 %v264
        %v272 = vunpack.c.h.b16 %v264
        %v273 = vunpack.c.l.b16 %v265
        %v274 = vunpack.c.h.b16 %v265
        %v275 = vpack.c.b16 %v269, %v269
        %v276 = vpack.c.b16 %v270, %v270
        %v277 = vpack.c.b16 %v271, %v271
        %v278 = vpack.c.b16 %v272, %v272
        %v279 = vpack.c.b16 %v273, %v273
        %v280 = vpack.c.b16 %v274, %v274
        %281 = vrot.lane.b32.xlu0 %v275, 64
        %v282 = vpop.permute.xlu0 %281
        %283 = vrot.lane.b32.xlu0 %v276, 64
        %v284 = vpop.permute.xlu0 %283
        %285 = vrot.lane.b32.xlu0 %v277, 64
        %v286 = vpop.permute.xlu0 %285
        %287 = vrot.lane.b32.xlu0 %v278, 64
        %v288 = vpop.permute.xlu0 %287
        %289 = vrot.lane.b32.xlu0 %v279, 64
        %v290 = vpop.permute.xlu0 %289
        %291 = vrot.lane.b32.xlu0 %v280, 64
        %v292 = vpop.permute.xlu0 %291
        %vm299 = vcmask 1043968
        %300 = vst.msk [vmem:[#allocation2] sm:$0xf] %vm299, %v282
        %301 = vst.msk [vmem:[#allocation2 + $0x14] sm:$0xf] %vm299, %v284
        %302 = vst.msk [vmem:[#allocation2 + $0x28] sm:$0xf] %vm299, %v286
        %303 = vst.msk [vmem:[#allocation2 + $0x3c] sm:$0xf] %vm299, %v288
        %304 = vst.msk [vmem:[#allocation2 + $0x50] sm:$0xf] %vm299, %v290
        %305 = vst.msk [vmem:[#allocation2 + $0x64] sm:$0xf] %vm299, %v292
        %v306 = vld [vmem:[%s215 + $0x2] sm:$0xff]
        %v307 = vld [vmem:[%s215 + $0xa] sm:$0xff]
        %v308 = vld [vmem:[%s215 + $0x12] sm:$0xff]
        %v309 = vld [vmem:[%s215 + $0x1a] sm:$0xff]
        %v310 = vld [vmem:[%s215 + $0x22] sm:$0xff]
        %v311 = vld [vmem:[%s215 + $0x2a] sm:$0xff]
        %v312 = vpack.c.bf16 %v307, %v306
        %v313 = vpack.c.bf16 %v309, %v308
        %v314 = vpack.c.bf16 %v311, %v310
        %v318 = vunpack.c.l.b16 %v312
        %v319 = vunpack.c.h.b16 %v312
        %v320 = vunpack.c.l.b16 %v313
        %v321 = vunpack.c.h.b16 %v313
        %v322 = vunpack.c.l.b16 %v314
        %v323 = vunpack.c.h.b16 %v314
        %v324 = vpack.c.b16 %v318, %v318
        %v325 = vpack.c.b16 %v319, %v319
        %v326 = vpack.c.b16 %v320, %v320
        %v327 = vpack.c.b16 %v321, %v321
        %v328 = vpack.c.b16 %v322, %v322
        %v329 = vpack.c.b16 %v323, %v323
        %336 = vst.msk [vmem:[#allocation2 + $0x4] sm:$0xf] %vm250, %v324
        %337 = vst.msk [vmem:[#allocation2 + $0x18] sm:$0xf] %vm250, %v325
        %338 = vst.msk [vmem:[#allocation2 + $0x2c] sm:$0xf] %vm250, %v326
        %339 = vst.msk [vmem:[#allocation2 + $0x40] sm:$0xf] %vm250, %v327
        %340 = vst.msk [vmem:[#allocation2 + $0x54] sm:$0xf] %vm250, %v328
        %341 = vst.msk [vmem:[#allocation2 + $0x68] sm:$0xf] %vm250, %v329
        %v342 = vld [vmem:[%s215 + $0x8] sm:$0xff]
        %v343 = vld [vmem:[%s215 + $0x10] sm:$0xff]
        %v344 = vld [vmem:[%s215 + $0x18] sm:$0xff]
        %v345 = vld [vmem:[%s215 + $0x20] sm:$0xff]
        %v346 = vld [vmem:[%s215 + $0x28] sm:$0xff]
        %v347 = vld [vmem:[%s215 + $0x30] sm:$0xff]
        %v348 = vpack.c.bf16 %v343, %v342
        %v349 = vpack.c.bf16 %v345, %v344
        %v350 = vpack.c.bf16 %v347, %v346
        %v354 = vunpack.c.l.b16 %v348
        %v355 = vunpack.c.h.b16 %v348
        %v356 = vunpack.c.l.b16 %v349
        %v357 = vunpack.c.h.b16 %v349
        %v358 = vunpack.c.l.b16 %v350
        %v359 = vunpack.c.h.b16 %v350
        %v360 = vpack.c.b16 %v354, %v354
        %v361 = vpack.c.b16 %v355, %v355
        %v362 = vpack.c.b16 %v356, %v356
        %v363 = vpack.c.b16 %v357, %v357
        %v364 = vpack.c.b16 %v358, %v358
        %v365 = vpack.c.b16 %v359, %v359
        %366 = vrot.lane.b32.xlu0 %v360, 64
        %v367 = vpop.permute.xlu0 %366
        %368 = vrot.lane.b32.xlu0 %v361, 64
        %v369 = vpop.permute.xlu0 %368
        %370 = vrot.lane.b32.xlu0 %v362, 64
        %v371 = vpop.permute.xlu0 %370
        %372 = vrot.lane.b32.xlu0 %v363, 64
        %v373 = vpop.permute.xlu0 %372
        %374 = vrot.lane.b32.xlu0 %v364, 64
        %v375 = vpop.permute.xlu0 %374
        %376 = vrot.lane.b32.xlu0 %v365, 64
        %v377 = vpop.permute.xlu0 %376
        %384 = vst.msk [vmem:[#allocation2 + $0x4] sm:$0xf] %vm299, %v367
        %385 = vst.msk [vmem:[#allocation2 + $0x18] sm:$0xf] %vm299, %v369
        %386 = vst.msk [vmem:[#allocation2 + $0x2c] sm:$0xf] %vm299, %v371
        %387 = vst.msk [vmem:[#allocation2 + $0x40] sm:$0xf] %vm299, %v373
        %388 = vst.msk [vmem:[#allocation2 + $0x54] sm:$0xf] %vm299, %v375
        %389 = vst.msk [vmem:[#allocation2 + $0x68] sm:$0xf] %vm299, %v377
        %v390 = vld [vmem:[%s215 + $0x9] sm:$0xff]
        %v391 = vld [vmem:[%s215 + $0x11] sm:$0xff]
        %v392 = vld [vmem:[%s215 + $0x19] sm:$0xff]
        %v393 = vld [vmem:[%s215 + $0x21] sm:$0xff]
        %v394 = vld [vmem:[%s215 + $0x29] sm:$0xff]
        %v395 = vld [vmem:[%s215 + $0x31] sm:$0xff]
        %v396 = vpack.c.bf16 %v391, %v390
        %v397 = vpack.c.bf16 %v393, %v392
        %v398 = vpack.c.bf16 %v395, %v394
        %v402 = vunpack.c.l.b16 %v396
        %v403 = vunpack.c.h.b16 %v396
        %v404 = vunpack.c.l.b16 %v397
        %v405 = vunpack.c.h.b16 %v397
        %v406 = vunpack.c.l.b16 %v398
        %v407 = vunpack.c.h.b16 %v398
        %v408 = vpack.c.b16 %v402, %v402
        %v409 = vpack.c.b16 %v403, %v403
        %v410 = vpack.c.b16 %v404, %v404
        %v411 = vpack.c.b16 %v405, %v405
        %v412 = vpack.c.b16 %v406, %v406
        %v413 = vpack.c.b16 %v407, %v407
        %420 = vst.msk [vmem:[#allocation2 + $0x8] sm:$0xf] %vm250, %v408
        %421 = vst.msk [vmem:[#allocation2 + $0x1c] sm:$0xf] %vm250, %v409
        %422 = vst.msk [vmem:[#allocation2 + $0x30] sm:$0xf] %vm250, %v410
        %423 = vst.msk [vmem:[#allocation2 + $0x44] sm:$0xf] %vm250, %v411
        %424 = vst.msk [vmem:[#allocation2 + $0x58] sm:$0xf] %vm250, %v412
        %425 = vst.msk [vmem:[#allocation2 + $0x6c] sm:$0xf] %vm250, %v413
        %v426 = vld [vmem:[%s215 + $0xa] sm:$0xff]
        %v427 = vld [vmem:[%s215 + $0x12] sm:$0xff]
        %v428 = vld [vmem:[%s215 + $0x1a] sm:$0xff]
        %v429 = vld [vmem:[%s215 + $0x22] sm:$0xff]
        %v430 = vld [vmem:[%s215 + $0x2a] sm:$0xff]
        %v431 = vld [vmem:[%s215 + $0x32] sm:$0xff]
        %v432 = vpack.c.bf16 %v427, %v426
        %v433 = vpack.c.bf16 %v429, %v428
        %v434 = vpack.c.bf16 %v431, %v430
        %v438 = vunpack.c.l.b16 %v432
        %v439 = vunpack.c.h.b16 %v432
        %v440 = vunpack.c.l.b16 %v433
        %v441 = vunpack.c.h.b16 %v433
        %v442 = vunpack.c.l.b16 %v434
        %v443 = vunpack.c.h.b16 %v434
        %v444 = vpack.c.b16 %v438, %v438
        %v445 = vpack.c.b16 %v439, %v439
        %v446 = vpack.c.b16 %v440, %v440
        %v447 = vpack.c.b16 %v441, %v441
        %v448 = vpack.c.b16 %v442, %v442
        %v449 = vpack.c.b16 %v443, %v443
        %450 = vrot.lane.b32.xlu0 %v444, 64
        %v451 = vpop.permute.xlu0 %450
        %452 = vrot.lane.b32.xlu0 %v445, 64
        %v453 = vpop.permute.xlu0 %452
        %454 = vrot.lane.b32.xlu0 %v446, 64
        %v455 = vpop.permute.xlu0 %454
        %456 = vrot.lane.b32.xlu0 %v447, 64
        %v457 = vpop.permute.xlu0 %456
        %458 = vrot.lane.b32.xlu0 %v448, 64
        %v459 = vpop.permute.xlu0 %458
        %460 = vrot.lane.b32.xlu0 %v449, 64
        %v461 = vpop.permute.xlu0 %460
        %468 = vst.msk [vmem:[#allocation2 + $0x8] sm:$0xf] %vm299, %v451
        %469 = vst.msk [vmem:[#allocation2 + $0x1c] sm:$0xf] %vm299, %v453
        %470 = vst.msk [vmem:[#allocation2 + $0x30] sm:$0xf] %vm299, %v455
        %471 = vst.msk [vmem:[#allocation2 + $0x44] sm:$0xf] %vm299, %v457
        %472 = vst.msk [vmem:[#allocation2 + $0x58] sm:$0xf] %vm299, %v459
        %473 = vst.msk [vmem:[#allocation2 + $0x6c] sm:$0xf] %vm299, %v461
        %v474 = vld [vmem:[%s215 + $0x10] sm:$0xff]
        %v475 = vld [vmem:[%s215 + $0x18] sm:$0xff]
        %v476 = vld [vmem:[%s215 + $0x20] sm:$0xff]
        %v477 = vld [vmem:[%s215 + $0x28] sm:$0xff]
        %v478 = vld [vmem:[%s215 + $0x30] sm:$0xff]
        %v479 = vld [vmem:[%s215 + $0x38] sm:$0xff]
        %v480 = vpack.c.bf16 %v475, %v474
        %v481 = vpack.c.bf16 %v477, %v476
        %v482 = vpack.c.bf16 %v479, %v478
        %v486 = vunpack.c.l.b16 %v480
        %v487 = vunpack.c.h.b16 %v480
        %v488 = vunpack.c.l.b16 %v481
        %v489 = vunpack.c.h.b16 %v481
        %v490 = vunpack.c.l.b16 %v482
        %v491 = vunpack.c.h.b16 %v482
        %v492 = vpack.c.b16 %v486, %v486
        %v493 = vpack.c.b16 %v487, %v487
        %v494 = vpack.c.b16 %v488, %v488
        %v495 = vpack.c.b16 %v489, %v489
        %v496 = vpack.c.b16 %v490, %v490
        %v497 = vpack.c.b16 %v491, %v491
        %504 = vst.msk [vmem:[#allocation2 + $0xc] sm:$0xf] %vm250, %v492
        %505 = vst.msk [vmem:[#allocation2 + $0x20] sm:$0xf] %vm250, %v493
        %506 = vst.msk [vmem:[#allocation2 + $0x34] sm:$0xf] %vm250, %v494
        %507 = vst.msk [vmem:[#allocation2 + $0x48] sm:$0xf] %vm250, %v495
        %508 = vst.msk [vmem:[#allocation2 + $0x5c] sm:$0xf] %vm250, %v496
        %509 = vst.msk [vmem:[#allocation2 + $0x70] sm:$0xf] %vm250, %v497
        %v510 = vld [vmem:[%s215 + $0x11] sm:$0xff]
        %v511 = vld [vmem:[%s215 + $0x19] sm:$0xff]
        %v512 = vld [vmem:[%s215 + $0x21] sm:$0xff]
        %v513 = vld [vmem:[%s215 + $0x29] sm:$0xff]
        %v514 = vld [vmem:[%s215 + $0x31] sm:$0xff]
        %v515 = vld [vmem:[%s215 + $0x39] sm:$0xff]
        %v516 = vpack.c.bf16 %v511, %v510
        %v517 = vpack.c.bf16 %v513, %v512
        %v518 = vpack.c.bf16 %v515, %v514
        %v522 = vunpack.c.l.b16 %v516
        %v523 = vunpack.c.h.b16 %v516
        %v524 = vunpack.c.l.b16 %v517
        %v525 = vunpack.c.h.b16 %v517
        %v526 = vunpack.c.l.b16 %v518
        %v527 = vunpack.c.h.b16 %v518
        %v528 = vpack.c.b16 %v522, %v522
        %v529 = vpack.c.b16 %v523, %v523
        %v530 = vpack.c.b16 %v524, %v524
        %v531 = vpack.c.b16 %v525, %v525
        %v532 = vpack.c.b16 %v526, %v526
        %v533 = vpack.c.b16 %v527, %v527
        %534 = vrot.lane.b32.xlu0 %v528, 64
        %v535 = vpop.permute.xlu0 %534
        %536 = vrot.lane.b32.xlu0 %v529, 64
        %v537 = vpop.permute.xlu0 %536
        %538 = vrot.lane.b32.xlu0 %v530, 64
        %v539 = vpop.permute.xlu0 %538
        %540 = vrot.lane.b32.xlu0 %v531, 64
        %v541 = vpop.permute.xlu0 %540
        %542 = vrot.lane.b32.xlu0 %v532, 64
        %v543 = vpop.permute.xlu0 %542
        %544 = vrot.lane.b32.xlu0 %v533, 64
        %v545 = vpop.permute.xlu0 %544
        %552 = vst.msk [vmem:[#allocation2 + $0xc] sm:$0xf] %vm299, %v535
        %553 = vst.msk [vmem:[#allocation2 + $0x20] sm:$0xf] %vm299, %v537
        %554 = vst.msk [vmem:[#allocation2 + $0x34] sm:$0xf] %vm299, %v539
        %555 = vst.msk [vmem:[#allocation2 + $0x48] sm:$0xf] %vm299, %v541
        %556 = vst.msk [vmem:[#allocation2 + $0x5c] sm:$0xf] %vm299, %v543
        %557 = vst.msk [vmem:[#allocation2 + $0x70] sm:$0xf] %vm299, %v545
        %v558 = vld [vmem:[%s215 + $0x12] sm:$0xff]
        %v559 = vld [vmem:[%s215 + $0x1a] sm:$0xff]
        %v560 = vld [vmem:[%s215 + $0x22] sm:$0xff]
        %v561 = vld [vmem:[%s215 + $0x2a] sm:$0xff]
        %v562 = vld [vmem:[%s215 + $0x32] sm:$0xff]
        %v563 = vld [vmem:[%s215 + $0x3a] sm:$0xff]
        %v564 = vpack.c.bf16 %v559, %v558
        %v565 = vpack.c.bf16 %v561, %v560
        %v566 = vpack.c.bf16 %v563, %v562
        %v570 = vunpack.c.l.b16 %v564
        %v571 = vunpack.c.h.b16 %v564
        %v572 = vunpack.c.l.b16 %v565
        %v573 = vunpack.c.h.b16 %v565
        %v574 = vunpack.c.l.b16 %v566
        %v575 = vunpack.c.h.b16 %v566
        %v576 = vpack.c.b16 %v570, %v570
        %v577 = vpack.c.b16 %v571, %v571
        %v578 = vpack.c.b16 %v572, %v572
        %v579 = vpack.c.b16 %v573, %v573
        %v580 = vpack.c.b16 %v574, %v574
        %v581 = vpack.c.b16 %v575, %v575
        %588 = vst.msk [vmem:[#allocation2 + $0x10] sm:$0xf] %vm250, %v576
        %589 = vst.msk [vmem:[#allocation2 + $0x24] sm:$0xf] %vm250, %v577
        %590 = vst.msk [vmem:[#allocation2 + $0x38] sm:$0xf] %vm250, %v578
        %591 = vst.msk [vmem:[#allocation2 + $0x4c] sm:$0xf] %vm250, %v579
        %592 = vst.msk [vmem:[#allocation2 + $0x60] sm:$0xf] %vm250, %v580
        %593 = vst.msk [vmem:[#allocation2 + $0x74] sm:$0xf] %vm250, %v581
        %v594 = vld [vmem:[#allocation2] sm:$0xff]
        %v595 = vld [vmem:[#allocation2 + $0x8] sm:$0xff]
        %v596 = vld [vmem:[#allocation2 + $0x10] sm:$0xf]
        %v597 = vld [vmem:[#allocation2 + $0x14] sm:$0xff]
        %v598 = vld [vmem:[#allocation2 + $0x1c] sm:$0xff]
        %v599 = vld [vmem:[#allocation2 + $0x24] sm:$0xf]
        %v600 = vld [vmem:[#allocation2 + $0x28] sm:$0xff]
        %v601 = vld [vmem:[#allocation2 + $0x30] sm:$0xff]
        %v602 = vld [vmem:[#allocation2 + $0x38] sm:$0xf]
        %v603 = vld [vmem:[#allocation2 + $0x3c] sm:$0xff]
        %v604 = vld [vmem:[#allocation2 + $0x44] sm:$0xff]
        %v605 = vld [vmem:[#allocation2 + $0x4c] sm:$0xf]
        %v606 = vld [vmem:[#allocation2 + $0x50] sm:$0xff]
        %v607 = vld [vmem:[#allocation2 + $0x58] sm:$0xff]
        %v608 = vld [vmem:[#allocation2 + $0x60] sm:$0xf]
        %v609 = vld [vmem:[#allocation2 + $0x64] sm:$0xff]
        %v610 = vld [vmem:[#allocation2 + $0x6c] sm:$0xff]
        %v611 = vld [vmem:[#allocation2 + $0x74] sm:$0xf]
        %v612 = vld [vmem:[#allocation3] sm:$0xf]
        %v613 = vld [vmem:[#allocation3 + $0x4] sm:$0xf]
        %v614 = vld [vmem:[#allocation3 + $0x8] sm:$0xf]
        %v615 = vld [vmem:[#allocation3 + $0xc] sm:$0xf]
        %v616 = vld [vmem:[#allocation3 + $0x10] sm:$0xf]
        %v617 = vld [vmem:[#allocation3 + $0x14] sm:$0xf]
        %v618 = vld [vmem:[#allocation3 + $0x18] sm:$0xf]
        %v619 = vld [vmem:[#allocation3 + $0x1c] sm:$0xf]
        %v620 = vld [vmem:[#allocation3 + $0x20] sm:$0xf]
        %v621 = vld [vmem:[#allocation3 + $0x24] sm:$0xf]
        %v622 = vld [vmem:[#allocation3 + $0x28] sm:$0xf]
        %v623 = vld [vmem:[#allocation3 + $0x2c] sm:$0xf]
        %v624 = vld [vmem:[#allocation3 + $0x30] sm:$0xf]
        %v625 = vld [vmem:[#allocation3 + $0x34] sm:$0xf]
        %v626 = vld [vmem:[#allocation3 + $0x38] sm:$0xf]
        %v627 = vld [vmem:[#allocation3 + $0x3c] sm:$0xf]
        %v628 = vld [vmem:[#allocation3 + $0x40] sm:$0xf]
        %v629 = vld [vmem:[#allocation3 + $0x44] sm:$0xf]
        %v630 = vld [vmem:[#allocation3 + $0x48] sm:$0xf]
        %v631 = vld [vmem:[#allocation3 + $0x4c] sm:$0xf]
        %v632 = vld [vmem:[#allocation3 + $0x50] sm:$0xf]
        %v633 = vld [vmem:[#allocation3 + $0x54] sm:$0xf]
        %v634 = vld [vmem:[#allocation3 + $0x58] sm:$0xf]
        %v635 = vld [vmem:[#allocation3 + $0x5c] sm:$0xf]
        %v636 = vld [vmem:[#allocation3 + $0x60] sm:$0xf]
        %v637 = vld [vmem:[#allocation3 + $0x64] sm:$0xf]
        %v638 = vld [vmem:[#allocation3 + $0x68] sm:$0xf]
        %v639 = vld [vmem:[#allocation3 + $0x6c] sm:$0xf]
        %v640 = vld [vmem:[#allocation3 + $0x70] sm:$0xf]
        %v641 = vld [vmem:[#allocation3 + $0x74] sm:$0xf]
        %v642 = vld [vmem:[#allocation3 + $0x78] sm:$0xf]
        %v643 = vld [vmem:[#allocation3 + $0x7c] sm:$0xf]
        %v644 = vld [vmem:[#allocation3 + $0x80] sm:$0xf]
        %v645 = vld [vmem:[#allocation3 + $0x84] sm:$0xf]
        %v646 = vld [vmem:[#allocation3 + $0x88] sm:$0xf]
        %v647 = vld [vmem:[#allocation3 + $0x8c] sm:$0xf]
        %v648 = vld [vmem:[#allocation3 + $0x90] sm:$0xf]
        %v649 = vld [vmem:[#allocation3 + $0x94] sm:$0xf]
        %v650 = vld [vmem:[#allocation3 + $0x98] sm:$0xf]
        %v651 = vld [vmem:[#allocation3 + $0x9c] sm:$0xf]
        %v652 = vld [vmem:[#allocation3 + $0xa0] sm:$0xf]
        %v653 = vld [vmem:[#allocation3 + $0xa4] sm:$0xf]
        %v654 = vld [vmem:[#allocation3 + $0xa8] sm:$0xf]
        %v655 = vld [vmem:[#allocation3 + $0xac] sm:$0xf]
        %v656 = vld [vmem:[#allocation3 + $0xb0] sm:$0xf]
        %v657 = vld [vmem:[#allocation3 + $0xb4] sm:$0xf]
        %v658 = vld [vmem:[#allocation3 + $0xb8] sm:$0xf]
        %v659 = vld [vmem:[#allocation3 + $0xbc] sm:$0xf]
        %v660 = vld [vmem:[#allocation3 + $0xc0] sm:$0xf]
        %v661 = vld [vmem:[#allocation3 + $0xc4] sm:$0xf]
        %v662 = vld [vmem:[#allocation3 + $0xc8] sm:$0xf]
        %v663 = vld [vmem:[#allocation3 + $0xcc] sm:$0xf]
        %v664 = vld [vmem:[#allocation3 + $0xd0] sm:$0xf]
        %v665 = vld [vmem:[#allocation3 + $0xd4] sm:$0xf]
        %v666 = vld [vmem:[#allocation3 + $0xd8] sm:$0xf]
        %v667 = vld [vmem:[#allocation3 + $0xdc] sm:$0xf]
        %v668 = vld [vmem:[#allocation3 + $0xe0] sm:$0xf]
        %v669 = vld [vmem:[#allocation3 + $0xe4] sm:$0xf]
        %v670 = vld [vmem:[#allocation3 + $0xe8] sm:$0xf]
        %v671 = vld [vmem:[#allocation3 + $0xec] sm:$0xf]
        %v672 = vld [vmem:[#allocation3 + $0xf0] sm:$0xf]
        %v673 = vld [vmem:[#allocation3 + $0xf4] sm:$0xf]
        %v674 = vld [vmem:[#allocation3 + $0xf8] sm:$0xf]
        %v675 = vld [vmem:[#allocation3 + $0xfc] sm:$0xf]
        %v676 = vld [vmem:[#allocation3 + $0x100] sm:$0xf]
        %v677 = vld [vmem:[#allocation3 + $0x104] sm:$0xf]
        %v678 = vld [vmem:[#allocation3 + $0x108] sm:$0xf]
        %v679 = vld [vmem:[#allocation3 + $0x10c] sm:$0xf]
        %v680 = vld [vmem:[#allocation3 + $0x110] sm:$0xf]
        %v681 = vld [vmem:[#allocation3 + $0x114] sm:$0xf]
        %v682 = vld [vmem:[#allocation3 + $0x118] sm:$0xf]
        %v683 = vld [vmem:[#allocation3 + $0x11c] sm:$0xf]
        %v684 = vld [vmem:[%s218] sm:$0x1]
        %v686 = vlaneseq
        %v687 = vshrl.u32 %v686, 7
        %v688 = vsub.s32 0, %v687
        %v689 = vrot.slane %v684, %v688
        %v709 = vunpack.c.l.b16 %v594
        %v710 = vunpack.c.h.b16 %v594
        %v711 = vunpack.c.l.b16 %v595
        %v712 = vunpack.c.h.b16 %v595
        %v713 = vunpack.c.l.b16 %v596
        %v714 = vunpack.c.l.b16 %v597
        %v715 = vunpack.c.h.b16 %v597
        %v716 = vunpack.c.l.b16 %v598
        %v717 = vunpack.c.h.b16 %v598
        %v718 = vunpack.c.l.b16 %v599
        %v719 = vunpack.c.l.b16 %v600
        %v720 = vunpack.c.h.b16 %v600
        %v721 = vunpack.c.l.b16 %v601
        %v722 = vunpack.c.h.b16 %v601
        %v723 = vunpack.c.l.b16 %v602
        %v724 = vunpack.c.l.b16 %v603
        %v725 = vunpack.c.h.b16 %v603
        %v726 = vunpack.c.l.b16 %v604
        %v727 = vunpack.c.h.b16 %v604
        %v728 = vunpack.c.l.b16 %v605
        %v729 = vunpack.c.l.b16 %v606
        %v730 = vunpack.c.h.b16 %v606
        %v731 = vunpack.c.l.b16 %v607
        %v732 = vunpack.c.h.b16 %v607
        %v733 = vunpack.c.l.b16 %v608
        %v734 = vunpack.c.l.b16 %v609
        %v735 = vunpack.c.h.b16 %v609
        %v736 = vunpack.c.l.b16 %v610
        %v737 = vunpack.c.h.b16 %v610
        %v738 = vunpack.c.l.b16 %v611
        %v739 = vpack.c.b16 %v714, %v709
        %v740 = vpack.c.b16 %v715, %v710
        %v741 = vpack.c.b16 %v716, %v711
        %v742 = vpack.c.b16 %v717, %v712
        %v743 = vpack.c.b16 %v718, %v713
        %v744 = vpack.c.b16 %v724, %v719
        %v745 = vpack.c.b16 %v725, %v720
        %v746 = vpack.c.b16 %v726, %v721
        %v747 = vpack.c.b16 %v727, %v722
        %v748 = vpack.c.b16 %v728, %v723
        %v749 = vpack.c.b16 %v734, %v729
        %v750 = vpack.c.b16 %v735, %v730
        %v751 = vpack.c.b16 %v736, %v731
        %v752 = vpack.c.b16 %v737, %v732
        %v753 = vpack.c.b16 %v738, %v733
        %v838 = vunpack.c.l.b16 %v612
        %v839 = vunpack.c.l.b16 %v613
        %v840 = vunpack.c.l.b16 %v614
        %v841 = vunpack.c.l.b16 %v615
        %v842 = vunpack.c.l.b16 %v616
        %v843 = vunpack.c.l.b16 %v617
        %v844 = vunpack.c.l.b16 %v618
        %v845 = vunpack.c.l.b16 %v619
        %v846 = vunpack.c.l.b16 %v620
        %v847 = vunpack.c.l.b16 %v621
        %v848 = vunpack.c.l.b16 %v622
        %v849 = vunpack.c.l.b16 %v623
        %v850 = vunpack.c.l.b16 %v624
        %v851 = vunpack.c.l.b16 %v625
        %v852 = vunpack.c.l.b16 %v626
        %v853 = vunpack.c.l.b16 %v627
        %v854 = vunpack.c.l.b16 %v628
        %v855 = vunpack.c.l.b16 %v629
        %v856 = vunpack.c.l.b16 %v630
        %v857 = vunpack.c.l.b16 %v631
        %v858 = vunpack.c.l.b16 %v632
        %v859 = vunpack.c.l.b16 %v633
        %v860 = vunpack.c.l.b16 %v634
        %v861 = vunpack.c.l.b16 %v635
        %v862 = vunpack.c.l.b16 %v636
        %v863 = vunpack.c.l.b16 %v637
        %v864 = vunpack.c.l.b16 %v638
        %v865 = vunpack.c.l.b16 %v639
        %v866 = vunpack.c.l.b16 %v640
        %v867 = vunpack.c.l.b16 %v641
        %v868 = vunpack.c.l.b16 %v642
        %v869 = vunpack.c.l.b16 %v643
        %v870 = vunpack.c.l.b16 %v644
        %v871 = vunpack.c.l.b16 %v645
        %v872 = vunpack.c.l.b16 %v646
        %v873 = vunpack.c.l.b16 %v647
        %v874 = vunpack.c.l.b16 %v648
        %v875 = vunpack.c.l.b16 %v649
        %v876 = vunpack.c.l.b16 %v650
        %v877 = vunpack.c.l.b16 %v651
        %v878 = vunpack.c.l.b16 %v652
        %v879 = vunpack.c.l.b16 %v653
        %v880 = vunpack.c.l.b16 %v654
        %v881 = vunpack.c.l.b16 %v655
        %v882 = vunpack.c.l.b16 %v656
        %v883 = vunpack.c.l.b16 %v657
        %v884 = vunpack.c.l.b16 %v658
        %v885 = vunpack.c.l.b16 %v659
        %v886 = vunpack.c.l.b16 %v660
        %v887 = vunpack.c.l.b16 %v661
        %v888 = vunpack.c.l.b16 %v662
        %v889 = vunpack.c.l.b16 %v663
        %v890 = vunpack.c.l.b16 %v664
        %v891 = vunpack.c.l.b16 %v665
        %v892 = vunpack.c.l.b16 %v666
        %v893 = vunpack.c.l.b16 %v667
        %v894 = vunpack.c.l.b16 %v668
        %v895 = vunpack.c.l.b16 %v669
        %v896 = vunpack.c.l.b16 %v670
        %v897 = vunpack.c.l.b16 %v671
        %v898 = vunpack.c.l.b16 %v672
        %v899 = vunpack.c.l.b16 %v673
        %v900 = vunpack.c.l.b16 %v674
        %v901 = vunpack.c.l.b16 %v675
        %v902 = vunpack.c.l.b16 %v676
        %v903 = vunpack.c.l.b16 %v677
        %v904 = vunpack.c.l.b16 %v678
        %v905 = vunpack.c.l.b16 %v679
        %v906 = vunpack.c.l.b16 %v680
        %v907 = vunpack.c.l.b16 %v681
        %v908 = vunpack.c.l.b16 %v682
        %v909 = vunpack.c.l.b16 %v683
        %v910 = vpack.c.b16 %v839, %v838
        %v911 = vpack.c.b16 %v841, %v840
        %v912 = vpack.c.b16 %v843, %v842
        %v913 = vpack.c.b16 %v845, %v844
        %v914 = vpack.c.b16 %v847, %v846
        %v915 = vpack.c.b16 %v849, %v848
        %v916 = vpack.c.b16 %v851, %v850
        %v917 = vpack.c.b16 %v853, %v852
        %v918 = vpack.c.b16 %v855, %v854
        %v919 = vpack.c.b16 %v857, %v856
        %v920 = vpack.c.b16 %v859, %v858
        %v921 = vpack.c.b16 %v861, %v860
        %v922 = vpack.c.b16 %v863, %v862
        %v923 = vpack.c.b16 %v865, %v864
        %v924 = vpack.c.b16 %v867, %v866
        %v925 = vpack.c.b16 %v869, %v868
        %v926 = vpack.c.b16 %v871, %v870
        %v927 = vpack.c.b16 %v873, %v872
        %v928 = vpack.c.b16 %v875, %v874
        %v929 = vpack.c.b16 %v877, %v876
        %v930 = vpack.c.b16 %v879, %v878
        %v931 = vpack.c.b16 %v881, %v880
        %v932 = vpack.c.b16 %v883, %v882
        %v933 = vpack.c.b16 %v885, %v884
        %v934 = vpack.c.b16 %v887, %v886
        %v935 = vpack.c.b16 %v889, %v888
        %v936 = vpack.c.b16 %v891, %v890
        %v937 = vpack.c.b16 %v893, %v892
        %v938 = vpack.c.b16 %v895, %v894
        %v939 = vpack.c.b16 %v897, %v896
        %v940 = vpack.c.b16 %v899, %v898
        %v941 = vpack.c.b16 %v901, %v900
        %v942 = vpack.c.b16 %v903, %v902
        %v943 = vpack.c.b16 %v905, %v904
        %v944 = vpack.c.b16 %v907, %v906
        %v945 = vpack.c.b16 %v909, %v908
        %vm982 = vcmask 523264
        %v984 = vsel %vm982, %v743, 0
        %v987 = vsel %vm982, %v748, 0
        %v990 = vsel %vm982, %v753, 0
        %992 = vmatprep.subr.bf16.mxu0 0
        %993 = vmatpush1.bf16.msra.mxu0 %v917
        %994 = vmatprep.subr.bf16.mxu0 0
        %995 = vmatpush1.bf16.msra.mxu0 %v916
        %996 = vmatprep.subr.bf16.mxu0 0
        %997 = vmatpush1.bf16.msra.mxu0 %v915
        %998 = vmatprep.subr.bf16.mxu0 0
        %999 = vmatpush1.bf16.msra.mxu0 %v914
        %1000 = vmatprep.subr.bf16.mxu0 0
        %1001 = vmatpush1.bf16.msra.mxu0 %v913
        %1002 = vmatprep.subr.bf16.mxu0 0
        %1003 = vmatpush1.bf16.msra.mxu0 %v912
        %1004 = vmatprep.subr.bf16.mxu0 0
        %1005 = vmatpush1.bf16.msra.mxu0 %v911
        %1006 = vmatprep.subr.bf16.mxu0 0
        %1007 = vmatpush1.bf16.msra.mxu0 %v910
        %1008 = vmatprep.subr.bf16.mxu0 0
        %1009 = vmatpush2.bf16.msra.mxu0 %v925
        %1010 = vmatprep.subr.bf16.mxu0 0
        %1011 = vmatpush2.bf16.msra.mxu0 %v924
        %1012 = vmatprep.subr.bf16.mxu0 0
        %1013 = vmatpush2.bf16.msra.mxu0 %v923
        %1014 = vmatprep.subr.bf16.mxu0 0
        %1015 = vmatpush2.bf16.msra.mxu0 %v922
        %1016 = vmatprep.subr.bf16.mxu0 0
        %1017 = vmatpush2.bf16.msra.mxu0 %v921
        %1018 = vmatprep.subr.bf16.mxu0 0
        %1019 = vmatpush2.bf16.msra.mxu0 %v920
        %1020 = vmatprep.subr.bf16.mxu0 0
        %1021 = vmatpush2.bf16.msra.mxu0 %v919
        %1022 = vmatprep.subr.bf16.mxu0 0
        %1023 = vmatpush2.bf16.msra.mxu0 %v918
        %1024 = vmatprep.mubr.bf16.mxu0 %v740
        %1025 = vmatmul.mubr.bf16.gmra.mxu0 %v739
        %v1026 = vpop.f32.mrf.mxu0
        %v1027 = vadd.f32 %v689, %v1026
        %v1028 = vpop.f32.mrf.mxu0
        %v1029 = vpop.f32.mrf.mxu0
        %v1030 = vadd.f32 %v689, %v1029
        %v1031 = vpop.f32.mrf.mxu0
        %1032 = vmatprep.mubr.bf16.mxu0 %v745
        %1033 = vmatmul.mubr.bf16.gmra.mxu0 %v744
        %v1034 = vpop.f32.mrf.mxu0
        %v1035 = vadd.f32 %v689, %v1034
        %v1036 = vpop.f32.mrf.mxu0
        %v1037 = vpop.f32.mrf.mxu0
        %v1038 = vadd.f32 %v689, %v1037
        %v1039 = vpop.f32.mrf.mxu0
        %1040 = vmatprep.mubr.bf16.mxu0 %v750
        %1041 = vmatmul.mubr.bf16.gmra.mxu0 %v749
        %v1042 = vpop.f32.mrf.mxu0
        %v1043 = vadd.f32 %v689, %v1042
        %v1044 = vpop.f32.mrf.mxu0
        %v1045 = vpop.f32.mrf.mxu0
        %v1046 = vadd.f32 %v689, %v1045
        %v1047 = vpop.f32.mrf.mxu0
        %1048 = vdwg.mxu0
        %1049 = vmatprep.subr.bf16.mxu0 0
        %1050 = vmatpush1.bf16.msra.mxu0 %v933
        %1051 = vmatprep.subr.bf16.mxu0 0
        %1052 = vmatpush1.bf16.msra.mxu0 %v932
        %1053 = vmatprep.subr.bf16.mxu0 0
        %1054 = vmatpush1.bf16.msra.mxu0 %v931
        %1055 = vmatprep.subr.bf16.mxu0 0
        %1056 = vmatpush1.bf16.msra.mxu0 %v930
        %1057 = vmatprep.subr.bf16.mxu0 0
        %1058 = vmatpush1.bf16.msra.mxu0 %v929
        %1059 = vmatprep.subr.bf16.mxu0 0
        %1060 = vmatpush1.bf16.msra.mxu0 %v928
        %1061 = vmatprep.subr.bf16.mxu0 0
        %1062 = vmatpush1.bf16.msra.mxu0 %v927
        %1063 = vmatprep.subr.bf16.mxu0 0
        %1064 = vmatpush1.bf16.msra.mxu0 %v926
        %1065 = vmatprep.subr.bf16.mxu0 0
        %1066 = vmatpush2.bf16.msra.mxu0 %v941
        %1067 = vmatprep.subr.bf16.mxu0 0
        %1068 = vmatpush2.bf16.msra.mxu0 %v940
        %1069 = vmatprep.subr.bf16.mxu0 0
        %1070 = vmatpush2.bf16.msra.mxu0 %v939
        %1071 = vmatprep.subr.bf16.mxu0 0
        %1072 = vmatpush2.bf16.msra.mxu0 %v938
        %1073 = vmatprep.subr.bf16.mxu0 0
        %1074 = vmatpush2.bf16.msra.mxu0 %v937
        %1075 = vmatprep.subr.bf16.mxu0 0
        %1076 = vmatpush2.bf16.msra.mxu0 %v936
        %1077 = vmatprep.subr.bf16.mxu0 0
        %1078 = vmatpush2.bf16.msra.mxu0 %v935
        %1079 = vmatprep.subr.bf16.mxu0 0
        %1080 = vmatpush2.bf16.msra.mxu0 %v934
        %1081 = vmatprep.mubr.bf16.mxu0 %v742
        %1082 = vmatmul.mubr.bf16.gmra.mxu0 %v741
        %v1083 = vpop.f32.mrf.mxu0
        %v1084 = vadd.f32 %v1027, %v1083
        %v1085 = vpop.f32.mrf.mxu0
        %v1086 = vpop.f32.mrf.mxu0
        %v1087 = vadd.f32 %v1030, %v1086
        %v1088 = vpop.f32.mrf.mxu0
        %1089 = vmatprep.mubr.bf16.mxu0 %v747
        %1090 = vmatmul.mubr.bf16.gmra.mxu0 %v746
        %v1091 = vpop.f32.mrf.mxu0
        %v1092 = vadd.f32 %v1035, %v1091
        %v1093 = vpop.f32.mrf.mxu0
        %v1094 = vpop.f32.mrf.mxu0
        %v1095 = vadd.f32 %v1038, %v1094
        %v1096 = vpop.f32.mrf.mxu0
        %1097 = vmatprep.mubr.bf16.mxu0 %v752
        %1098 = vmatmul.mubr.bf16.gmra.mxu0 %v751
        %v1099 = vpop.f32.mrf.mxu0
        %v1100 = vadd.f32 %v1043, %v1099
        %v1101 = vpop.f32.mrf.mxu0
        %v1102 = vpop.f32.mrf.mxu0
        %v1103 = vadd.f32 %v1046, %v1102
        %v1104 = vpop.f32.mrf.mxu0
        %1105 = vdwg.mxu0
        %1106 = vmatprep.subr.bf16.mxu0 0
        %1107 = vmatpush1.bf16.msra.mxu0 0
        %1108 = vmatprep.subr.bf16.mxu0 0
        %1109 = vmatpush1.bf16.msra.mxu0 0
        %1110 = vmatprep.subr.bf16.mxu0 0
        %1111 = vmatpush1.bf16.msra.mxu0 0
        %1112 = vmatprep.subr.bf16.mxu0 0
        %1113 = vmatpush1.bf16.msra.mxu0 0
        %1114 = vmatprep.subr.bf16.mxu0 0
        %1115 = vmatpush1.bf16.msra.mxu0 %v945
        %1116 = vmatprep.subr.bf16.mxu0 0
        %1117 = vmatpush1.bf16.msra.mxu0 %v944
        %1118 = vmatprep.subr.bf16.mxu0 0
        %1119 = vmatpush1.bf16.msra.mxu0 %v943
        %1120 = vmatprep.subr.bf16.mxu0 0
        %1121 = vmatpush1.bf16.msra.mxu0 %v942
        %1122 = vmatprep.subr.bf16.mxu0 0
        %1123 = vmatpush2.bf16.msra.mxu0 0
        %1124 = vmatprep.subr.bf16.mxu0 0
        %1125 = vmatpush2.bf16.msra.mxu0 0
        %1126 = vmatprep.subr.bf16.mxu0 0
        %1127 = vmatpush2.bf16.msra.mxu0 0
        %1128 = vmatprep.subr.bf16.mxu0 0
        %1129 = vmatpush2.bf16.msra.mxu0 0
        %1130 = vmatprep.subr.bf16.mxu0 0
        %1131 = vmatpush2.bf16.msra.mxu0 0
        %1132 = vmatprep.subr.bf16.mxu0 0
        %1133 = vmatpush2.bf16.msra.mxu0 0
        %1134 = vmatprep.subr.bf16.mxu0 0
        %1135 = vmatpush2.bf16.msra.mxu0 0
        %1136 = vmatprep.subr.bf16.mxu0 0
        %1137 = vmatpush2.bf16.msra.mxu0 0
        %1138 = vmatprep.mubr.bf16.mxu0 0
        %1139 = vmatmul.mubr.bf16.gmra.mxu0 %v984
        %v1140 = vpop.f32.mrf.mxu0
        %v1141 = vadd.f32 %v1084, %v1140
        %v1142 = vpop.f32.mrf.mxu0
        %v1143 = vpop.f32.mrf.mxu0
        %v1144 = vadd.f32 %v1087, %v1143
        %v1145 = vpop.f32.mrf.mxu0
        %1146 = vmatprep.mubr.bf16.mxu0 0
        %1147 = vmatmul.mubr.bf16.gmra.mxu0 %v987
        %v1148 = vpop.f32.mrf.mxu0
        %v1149 = vadd.f32 %v1092, %v1148
        %v1150 = vpop.f32.mrf.mxu0
        %v1151 = vpop.f32.mrf.mxu0
        %v1152 = vadd.f32 %v1095, %v1151
        %v1153 = vpop.f32.mrf.mxu0
        %1154 = vmatprep.mubr.bf16.mxu0 0
        %1155 = vmatmul.mubr.bf16.gmra.mxu0 %v990
        %v1156 = vpop.f32.mrf.mxu0
        %v1157 = vadd.f32 %v1100, %v1156
        %v1158 = vpop.f32.mrf.mxu0
        %v1159 = vpop.f32.mrf.mxu0
        %v1160 = vadd.f32 %v1103, %v1159
        %v1161 = vpop.f32.mrf.mxu0
        %1162 = vdwg.mxu0
        %v1163 = vmax.f32 %v1141, 0.0
        %v1164 = vmax.f32 %v1144, 0.0
        %v1165 = vmax.f32 %v1149, 0.0
        %v1166 = vmax.f32 %v1152, 0.0
        %v1167 = vmax.f32 %v1157, 0.0
        %v1168 = vmax.f32 %v1160, 0.0
        %1169 = vst [vmem:[%s210] sm:$0xff] %v1163
        %1170 = vst [vmem:[%s210 + $0x8] sm:$0xff] %v1164
        %1171 = vst [vmem:[%s210 + $0x10] sm:$0xff] %v1165
        %1172 = vst [vmem:[%s210 + $0x18] sm:$0xff] %v1166
        %1173 = vst [vmem:[%s210 + $0x20] sm:$0xff] %v1167
        %1174 = vst [vmem:[%s210 + $0x28] sm:$0xff] %v1168
        %s1175 = sand.u32 %s118, 1
        %s1176 = scalar_lea.sflag [#allocation5], %s1175
        %s1177 = sand.u32 %s118, 1
        %s1178 = smul.addr %s1177, 48
        %s1179 = scalar_lea.vmem [#allocation6], %s1178
        // Predicated region
        $region37: #{tpu_custom_call.1} parent=31 // pred_check
          %p1180 = pneg %p128
        $region38: #{tpu_custom_call.1} parent=31 // pred_check_branch
          %1182 = sbr.rel (%p1180) target = $region40
        $region39: #{tpu_custom_call.1} parent=31 // pred_region
          %s1184 = ssub.s32 768, 768
          %1185 = vsyncadd %s1176, %s1184
          %s1186 = smul.addr %s23, 6
          %s1187 = sadd.s32 %s22, %s1186
          %s1188 = smul.addr %s1187, 128
          %s1189 = scalar_lea.hbm %s3, %s1188
          %s1190 = sshll.u32 %s1179, 4
          %s1191 = int_to_ptr.vmem [resolvable:$true] %s1190
          %1196 = dma.vmem_to_hbm [thread:$0]  %s1191, 768, %s1189, %s1176, 128, 128, 8
        $region40: #{tpu_custom_call.1} parent=31 // pred_fallthru
          _
      $region32: #{tpu_custom_call.1} parent=5 // pred_fallthru
        _
      %p1197 = scmp.le.s32.totalorder 2, %s13
      // Predicated region
      $region41: #{tpu_custom_call.1} parent=5 // pred_check
        %p1198 = pneg %p1197
      $region42: #{tpu_custom_call.1} parent=5 // pred_check_branch
        %1200 = sbr.rel (%p1198) target = $region44
      $region43: #{tpu_custom_call.1} parent=5 // pred_region
        %s1201 = ssub.s32 %s13, 2
        // Predicated region
        $region45: #{tpu_custom_call.1} parent=43 // pred_check
          %p1202 = pneg %p134
        $region46: #{tpu_custom_call.1} parent=43 // pred_check_branch
          %1204 = sbr.rel (%p1202) target = $region48
        $region47: #{tpu_custom_call.1} parent=43 // pred_region
          %s1205 = sand.u32 %s119, 1
          %s1206 = scalar_lea.sflag [#allocation5], %s1205
          %s1207 = sand.u32 %s119, 1
          %s1208 = smul.addr %s1207, 48
          %s1209 = scalar_lea.vmem [#allocation6], %s1208
          %1210 = dma.done %s1206, 768
        $region48: #{tpu_custom_call.1} parent=43 // pred_fallthru
          _
      $region44: #{tpu_custom_call.1} parent=5 // pred_fallthru
        _
    $region6: #{tpu_custom_call.1} parent=1 // loop_footer
      %s17 = sadd.s32 1, %s13
    $region7: #{tpu_custom_call.1} parent=1 // loop_footer_branch
      %12 = sbr.rel target = $region3
    $region8: #{tpu_custom_call.1} parent=1 // loop_exit
      _
    %1211 = vsyncpa [#allocation4], 1
    %s1212 = scalar_lea.sflag [#allocation4], 1
    %1213 = vsyncpa %s1212, 1
    %1214 = vsyncpa [#allocation5], 1
    %s1215 = scalar_lea.sflag [#allocation5], 1
    %1216 = vsyncpa %s1215, 1

</llo_original>
